<compile_context>
chip_gen: v7x
topology: tpu7x:2x2x1
jax: 0.10.0
libtpu: 0.0.40
codegen_flags: <defaults>
</compile_context>

<pallas_src>
import jax
import jax.numpy as jnp
from jax.experimental import pallas as pl

# ---- "args" (synthetic, small) -------------------------------------------
B, S, D = 16, 8, 32          # batch, seq_len, embed_dim
H, T    = 64, 16             # hidden_dim, target_size
DROP_RATE = 0.1


def intent_head_kernel(cls_ref, mask_ref, wt_ref, bt_ref, wb_ref, bb_ref,
                       out_ref):
    # TODO(synk): the pretrained BertModel encoder (task1) has no clean Pallas
    # equivalent; this kernel starts from the encoder's CLS hidden state.
    h = cls_ref[...].astype(jnp.float32)                    # [B, D]

    # task2: Dropout -- precomputed scaled keep-mask (0 or 1/(1-p)).
    h = h * mask_ref[...]

    # task3: Classifier = Linear(D->H) -> ReLU -> Linear(H->T), all on MXU/VPU.
    mid = jnp.dot(h, wt_ref[...], preferred_element_type=jnp.float32) + bt_ref[...]
    mid = jnp.maximum(mid, 0.0)
    logit = jnp.dot(mid, wb_ref[...], preferred_element_type=jnp.float32) + bb_ref[...]
    out_ref[...] = logit.astype(out_ref.dtype)


def intent_model_forward(last_hidden_state, params, dropout_key=None,
                         drop_rate=DROP_RATE, targets=None, train=True):
    """Pallas forward for IntentModel: encoder last_hidden_state -> logits.

    `targets` is accepted for API parity with the torch forward but unused.
    """
    del targets
    w_top, b_top, w_bot, b_bot = params
    b, _, d = last_hidden_state.shape
    h = w_top.shape[1]
    t = w_bot.shape[1]

    # task2 (part 1): CLS-token selection at the pallas_call boundary so only
    # the [B, D] CLS slab is moved into VMEM (not the full [B, S, D] tile).
    cls = last_hidden_state[:, 0, :]

    # Dropout keep-mask, pre-scaled by 1/(1-p) (train) or identity (eval).
    # TODO(synk): pltpu.prng_seed/prng_random_bits have no interpret/CPU
    # lowering, so the mask is drawn with jax.random outside the kernel.
    if train and dropout_key is not None and drop_rate > 0.0:
        keep = jax.random.bernoulli(dropout_key, 1.0 - drop_rate, cls.shape)
        mask = keep.astype(jnp.float32) * (1.0 / (1.0 - drop_rate))
    else:
        mask = jnp.ones(cls.shape, jnp.float32)

    return pl.pallas_call(
        intent_head_kernel,
        out_shape=jax.ShapeDtypeStruct((b, t), jnp.float32),
        grid=(1,),                                    # single invocation
        in_specs=[
            pl.BlockSpec((b, d), lambda i: (0, 0)),   # CLS hidden
            pl.BlockSpec((b, d), lambda i: (0, 0)),   # dropout mask
            pl.BlockSpec((d, h), lambda i: (0, 0)),   # top weight
            pl.BlockSpec((1, h), lambda i: (0, 0)),   # top bias
            pl.BlockSpec((h, t), lambda i: (0, 0)),   # bottom weight
            pl.BlockSpec((1, t), lambda i: (0, 0)),   # bottom bias
        ],
        out_specs=pl.BlockSpec((b, t), lambda i: (0, 0)),
    )(cls, mask, w_top, b_top, w_bot, b_bot)


def init_params(key):
    """Deterministic nn.Linear-style init: U(-1/sqrt(fan_in), 1/sqrt(fan_in))."""
    k1, k2, k3, k4 = jax.random.split(key, 4)
    lim_top = 1.0 / (D ** 0.5)
    lim_bot = 1.0 / (H ** 0.5)
    w_top = jax.random.uniform(k1, (D, H), jnp.float32, -lim_top, lim_top)
    b_top = jax.random.uniform(k2, (1, H), jnp.float32, -lim_top, lim_top)
    w_bot = jax.random.uniform(k3, (H, T), jnp.float32, -lim_bot, lim_bot)
    b_bot = jax.random.uniform(k4, (1, T), jnp.float32, -lim_bot, lim_bot)
    return w_top, b_top, w_bot, b_bot


if __name__ == "__main__":
    root = jax.random.PRNGKey(0)
    k_x, k_p, k_drop = jax.random.split(root, 3)

    # Stand-in for encoder(**inputs).last_hidden_state
    last_hidden_state = jax.random.normal(k_x, (B, S, D), jnp.float32)
    targets = jnp.zeros((B,), jnp.int32)              # unused by forward
    params = init_params(k_p)

    logits = intent_model_forward(last_hidden_state, params,
                                  dropout_key=k_drop, targets=targets,
                                  train=True)
    logits = jax.block_until_ready(logits)

    assert logits.shape == (B, T), logits.shape
    assert bool(jnp.all(jnp.isfinite(logits)))
    print("KERNEL_OK")
</pallas_src>

<mosaic_0001>
module attributes {stable_mosaic.version = 11 : i64} {
  func.func @intent_head_kernel(%arg0: i32, %arg1: memref<16x32xf32, #tpu.memory_space<vmem>>, %arg2: memref<16x32xf32, #tpu.memory_space<vmem>>, %arg3: memref<32x64xf32, #tpu.memory_space<vmem>>, %arg4: memref<1x64xf32, #tpu.memory_space<vmem>>, %arg5: memref<64x16xf32, #tpu.memory_space<vmem>>, %arg6: memref<1x16xf32, #tpu.memory_space<vmem>>, %arg7: memref<16x16xf32, #tpu.memory_space<vmem>>) attributes {dimension_semantics = [#tpu.dimension_semantics<arbitrary>], iteration_bounds = array<i64: 1>, scalar_prefetch = 0 : i64, scratch_operands = 0 : i64, tpu.core_type = #tpu.core_type<tc>, window_params = [{pipeline_mode = #tpu.pipeline_mode<synchronous>, transform_indices = @transform_0, window_bounds = array<i64: 16, 32>}, {pipeline_mode = #tpu.pipeline_mode<synchronous>, transform_indices = @transform_1, window_bounds = array<i64: 16, 32>}, {pipeline_mode = #tpu.pipeline_mode<synchronous>, transform_indices = @transform_2, window_bounds = array<i64: 32, 64>}, {pipeline_mode = #tpu.pipeline_mode<synchronous>, transform_indices = @transform_3, window_bounds = array<i64: 1, 64>}, {pipeline_mode = #tpu.pipeline_mode<synchronous>, transform_indices = @transform_4, window_bounds = array<i64: 64, 16>}, {pipeline_mode = #tpu.pipeline_mode<synchronous>, transform_indices = @transform_5, window_bounds = array<i64: 1, 16>}, {pipeline_mode = #tpu.pipeline_mode<synchronous>, transform_indices = @transform_6, window_bounds = array<i64: 16, 16>}]} {
    %c0 = arith.constant 0 : index
    %c0_0 = arith.constant 0 : index
    %0 = vector.load %arg1[%c0, %c0_0] : memref<16x32xf32, #tpu.memory_space<vmem>>, vector<16x32xf32>
    %c0_1 = arith.constant 0 : index
    %c0_2 = arith.constant 0 : index
    %1 = vector.load %arg2[%c0_1, %c0_2] : memref<16x32xf32, #tpu.memory_space<vmem>>, vector<16x32xf32>
    %2 = arith.mulf %0, %1 : vector<16x32xf32>
    %c0_3 = arith.constant 0 : index
    %c0_4 = arith.constant 0 : index
    %3 = vector.load %arg3[%c0_3, %c0_4] : memref<32x64xf32, #tpu.memory_space<vmem>>, vector<32x64xf32>
    %cst = arith.constant dense<0.000000e+00> : vector<16x64xf32>
    %4 = tpu.matmul %2, %3, %cst {dimension_numbers = #tpu.dot_dimension_numbers<[1], [0], [0], [1], [0, 0, 1, 1], [], []>} : vector<16x32xf32>, vector<32x64xf32>, vector<16x64xf32> -> vector<16x64xf32>
    %c0_5 = arith.constant 0 : index
    %c0_6 = arith.constant 0 : index
    %5 = vector.load %arg4[%c0_5, %c0_6] : memref<1x64xf32, #tpu.memory_space<vmem>>, vector<1x64xf32>
    %6 = vector.broadcast %5 : vector<1x64xf32> to vector<16x64xf32>
    %7 = arith.addf %4, %6 : vector<16x64xf32>
    %cst_7 = arith.constant 0.000000e+00 : f32
    %8 = vector.broadcast %cst_7 : f32 to vector<16x64xf32>
    %9 = arith.maximumf %7, %8 : vector<16x64xf32>
    %c0_8 = arith.constant 0 : index
    %c0_9 = arith.constant 0 : index
    %10 = vector.load %arg5[%c0_8, %c0_9] : memref<64x16xf32, #tpu.memory_space<vmem>>, vector<64x16xf32>
    %cst_10 = arith.constant dense<0.000000e+00> : vector<16x16xf32>
    %11 = tpu.matmul %9, %10, %cst_10 {dimension_numbers = #tpu.dot_dimension_numbers<[1], [0], [0], [1], [0, 0, 1, 1], [], []>} : vector<16x64xf32>, vector<64x16xf32>, vector<16x16xf32> -> vector<16x16xf32>
    %c0_11 = arith.constant 0 : index
    %c0_12 = arith.constant 0 : index
    %12 = vector.load %arg6[%c0_11, %c0_12] : memref<1x16xf32, #tpu.memory_space<vmem>>, vector<1x16xf32>
    %13 = vector.broadcast %12 : vector<1x16xf32> to vector<16x16xf32>
    %14 = arith.addf %11, %13 : vector<16x16xf32>
    %c0_13 = arith.constant 0 : index
    %c0_14 = arith.constant 0 : index
    %15 = vector.load %arg7[%c0_13, %c0_14] : memref<16x16xf32, #tpu.memory_space<vmem>>, vector<16x16xf32>
    tpu.vector_store %arg7[%c0_13, %c0_14], %14 {strides = array<i32>} : memref<16x16xf32, #tpu.memory_space<vmem>>, vector<16x16xf32>,
    return
  }
  func.func @transform_0(%arg0: i32) -> (i32, i32) {
    %c0_i32 = arith.constant 0 : i32
    %c0_i32_0 = arith.constant 0 : i32
    %c0_i32_1 = arith.constant 0 : i32
    return %c0_i32, %c0_i32_0 : i32, i32
  }
  func.func @transform_1(%arg0: i32) -> (i32, i32) {
    %c0_i32 = arith.constant 0 : i32
    %c0_i32_0 = arith.constant 0 : i32
    %c0_i32_1 = arith.constant 0 : i32
    return %c0_i32, %c0_i32_0 : i32, i32
  }
  func.func @transform_2(%arg0: i32) -> (i32, i32) {
    %c0_i32 = arith.constant 0 : i32
    %c0_i32_0 = arith.constant 0 : i32
    %c0_i32_1 = arith.constant 0 : i32
    return %c0_i32, %c0_i32_0 : i32, i32
  }
  func.func @transform_3(%arg0: i32) -> (i32, i32) {
    %c0_i32 = arith.constant 0 : i32
    %c0_i32_0 = arith.constant 0 : i32
    %c0_i32_1 = arith.constant 0 : i32
    return %c0_i32, %c0_i32_0 : i32, i32
  }
  func.func @transform_4(%arg0: i32) -> (i32, i32) {
    %c0_i32 = arith.constant 0 : i32
    %c0_i32_0 = arith.constant 0 : i32
    %c0_i32_1 = arith.constant 0 : i32
    return %c0_i32, %c0_i32_0 : i32, i32
  }
  func.func @transform_5(%arg0: i32) -> (i32, i32) {
    %c0_i32 = arith.constant 0 : i32
    %c0_i32_0 = arith.constant 0 : i32
    %c0_i32_1 = arith.constant 0 : i32
    return %c0_i32, %c0_i32_0 : i32, i32
  }
  func.func @transform_6(%arg0: i32) -> (i32, i32) {
    %c0_i32 = arith.constant 0 : i32
    %c0_i32_0 = arith.constant 0 : i32
    %c0_i32_1 = arith.constant 0 : i32
    return %c0_i32, %c0_i32_0 : i32, i32
  }
}

</mosaic_0001>

<llo_original>
// kernel: tpu_custom_call.1
$region0: #{tpu_custom_call.1}
  #allocation0 [shape = 'u32[]', space=smem, size = 0x4, offset = 0x4, fixed_abs, tag = 'smem constant byte address 0x4 - core index']
  #allocation1 [shape = 'u32[144,128]{1,0:T(1,128)}', space=vmem, size = 0x12000, scoped, tag = 'internal scratch']
  %s0 = inlined_call_operand.vmem [shape: f32[16,32], index: 0, kind: input, shape index: {}]
  %s1 = inlined_call_operand.vmem [shape: f32[16,32], index: 1, kind: input, shape index: {}]
  %s2 = inlined_call_operand.vmem [shape: f32[32,64], index: 2, kind: input, shape index: {}]
  %s3 = inlined_call_operand.vmem [shape: f32[1,64], index: 3, kind: input, shape index: {}]
  %s4 = inlined_call_operand.vmem [shape: f32[64,16], index: 4, kind: input, shape index: {}]
  %s5 = inlined_call_operand.vmem [shape: f32[1,16], index: 5, kind: input, shape index: {}]
  %s6 = inlined_call_operand.hbm [shape: f32[16,16], index: 6, kind: output, shape index: {}]
  %s7 = sld [smem:[#allocation0]]
  $region34: #{tpu_custom_call.1} parent=0
    _
  %s9 = ssub.s32 1, %s7
  %s10 = scalar_select 0, %s9, %s7
  $region1: #{tpu_custom_call.1} parent=0
    #allocation2 [shape = 'u8[8192]{0}', space=vmem, size = 0x2000, scoped, tag = 'output window, operand 0, single buffered']
    #allocation3 [shape = 's32[1]{0}', space=sflag, size = 0x4, scoped, tag = 'scoped memory for tpu_custom_call.1']
    %11 = vsyncpa [#allocation3], 0
    // Predicated region
    $region2: #{tpu_custom_call.1} parent=1 // pred_check
      _
    $region3: #{tpu_custom_call.1} parent=1 // pred_check_branch
      %13 = sbr.rel (0) target = $region5
    $region4: #{tpu_custom_call.1} parent=1 // pred_region
      _
    $region5: #{tpu_custom_call.1} parent=1 // pred_fallthru
      _
    // Predicated region
    $region6: #{tpu_custom_call.1} parent=1 // pred_check
      _
    $region7: #{tpu_custom_call.1} parent=1 // pred_check_branch
      %15 = sbr.rel (0) target = $region9
    $region8: #{tpu_custom_call.1} parent=1 // pred_region
      _
    $region9: #{tpu_custom_call.1} parent=1 // pred_fallthru
      _
    // Predicated region
    $region10: #{tpu_custom_call.1} parent=1 // pred_check
      _
    $region11: #{tpu_custom_call.1} parent=1 // pred_check_branch
      %17 = sbr.rel (0) target = $region13
    $region12: #{tpu_custom_call.1} parent=1 // pred_region
      _
    $region13: #{tpu_custom_call.1} parent=1 // pred_fallthru
      _
    // Predicated region
    $region14: #{tpu_custom_call.1} parent=1 // pred_check
      _
    $region15: #{tpu_custom_call.1} parent=1 // pred_check_branch
      %19 = sbr.rel (0) target = $region17
    $region16: #{tpu_custom_call.1} parent=1 // pred_region
      _
    $region17: #{tpu_custom_call.1} parent=1 // pred_fallthru
      _
    // Predicated region
    $region18: #{tpu_custom_call.1} parent=1 // pred_check
      _
    $region19: #{tpu_custom_call.1} parent=1 // pred_check_branch
      %21 = sbr.rel (0) target = $region21
    $region20: #{tpu_custom_call.1} parent=1 // pred_region
      _
    $region21: #{tpu_custom_call.1} parent=1 // pred_fallthru
      _
    // Predicated region
    $region22: #{tpu_custom_call.1} parent=1 // pred_check
      _
    $region23: #{tpu_custom_call.1} parent=1 // pred_check_branch
      %23 = sbr.rel (0) target = $region25
    $region24: #{tpu_custom_call.1} parent=1 // pred_region
      _
    $region25: #{tpu_custom_call.1} parent=1 // pred_fallthru
      _
    %v24 = vld [vmem:[%s0] sm:$0xff]
    %v25 = vld [vmem:[%s0 + $0x8] sm:$0xff]
    %v26 = vld [vmem:[%s1] sm:$0xff]
    %v27 = vld [vmem:[%s1 + $0x8] sm:$0xff]
    %v28 = vmul.f32 %v24, %v26
    %v29 = vmul.f32 %v25, %v27
    %v30 = vld [vmem:[%s2] sm:$0xff]
    %v31 = vld [vmem:[%s2 + $0x8] sm:$0xff]
    %v32 = vld [vmem:[%s2 + $0x10] sm:$0xff]
    %v33 = vld [vmem:[%s2 + $0x18] sm:$0xff]
    %v34 = vld [vmem:[%s3] sm:$0x1]
    %v36 = vlaneseq
    %v37 = vshrl.u32 %v36, 7
    %v38 = vsub.s32 0, %v37
    %v39 = vrot.slane %v34, %v38
    %vm41 = vcmask 261120
    %v43 = vsel %vm41, %v28, 0
    %v46 = vsel %vm41, %v29, 0
    %48 = vmatprep.subr.mxu0 0.0
    %49 = vmatpush1.msra.mxu0 %v30
    %50 = vmatprep.subr.mxu0 0.0
    %51 = vmatpush1.msra.mxu0 %v31
    %52 = vmatprep.subr.mxu0 0.0
    %53 = vmatpush1.msra.mxu0 %v32
    %54 = vmatprep.subr.mxu0 0.0
    %55 = vmatpush1.msra.mxu0 %v33
    %56 = vmatprep.subr.mxu0 0.0
    %57 = vmatpush1.msra.mxu0 0.0
    %58 = vmatprep.subr.mxu0 0.0
    %59 = vmatpush1.msra.mxu0 0.0
    %60 = vmatprep.subr.mxu0 0.0
    %61 = vmatpush1.msra.mxu0 0.0
    %62 = vmatprep.subr.mxu0 0.0
    %63 = vmatpush1.msra.mxu0 0.0
    %64 = vmatprep.subr.mxu0 0.0
    %65 = vmatpush1.msra.mxu0 0.0
    %66 = vmatprep.subr.mxu0 0.0
    %67 = vmatpush1.msra.mxu0 0.0
    %68 = vmatprep.subr.mxu0 0.0
    %69 = vmatpush1.msra.mxu0 0.0
    %70 = vmatprep.subr.mxu0 0.0
    %71 = vmatpush1.msra.mxu0 0.0
    %72 = vmatprep.subr.mxu0 0.0
    %73 = vmatpush1.msra.mxu0 0.0
    %74 = vmatprep.subr.mxu0 0.0
    %75 = vmatpush1.msra.mxu0 0.0
    %76 = vmatprep.subr.mxu0 0.0
    %77 = vmatpush1.msra.mxu0 0.0
    %78 = vmatprep.subr.mxu0 0.0
    %79 = vmatpush1.msra.mxu0 0.0
    %80 = vmatprep.subr.mxu0 0.0
    %81 = vmatpush1.msra.mxu0 0.0
    %82 = vmatprep.subr.mxu0 0.0
    %83 = vmatpush1.msra.mxu0 0.0
    %84 = vmatprep.subr.mxu0 0.0
    %85 = vmatpush1.msra.mxu0 0.0
    %86 = vmatprep.subr.mxu0 0.0
    %87 = vmatpush1.msra.mxu0 0.0
    %88 = vmatprep.subr.mxu0 0.0
    %89 = vmatpush1.msra.mxu0 0.0
    %90 = vmatprep.subr.mxu0 0.0
    %91 = vmatpush1.msra.mxu0 0.0
    %92 = vmatprep.subr.mxu0 0.0
    %93 = vmatpush1.msra.mxu0 0.0
    %94 = vmatprep.subr.mxu0 0.0
    %95 = vmatpush1.msra.mxu0 0.0
    %96 = vmatprep.subr.mxu0 0.0
    %97 = vmatpush1.msra.mxu0 0.0
    %98 = vmatprep.subr.mxu0 0.0
    %99 = vmatpush1.msra.mxu0 0.0
    %100 = vmatprep.subr.mxu0 0.0
    %101 = vmatpush1.msra.mxu0 0.0
    %102 = vmatprep.subr.mxu0 0.0
    %103 = vmatpush1.msra.mxu0 0.0
    %104 = vmatprep.subr.mxu0 0.0
    %105 = vmatpush1.msra.mxu0 0.0
    %106 = vmatprep.subr.mxu0 0.0
    %107 = vmatpush1.msra.mxu0 0.0
    %108 = vmatprep.subr.mxu0 0.0
    %109 = vmatpush1.msra.mxu0 0.0
    %110 = vmatprep.subr.mxu0 0.0
    %111 = vmatpush1.msra.mxu0 0.0
    %112 = vmatprep.mubr.f32.mxu0 0.0
    %113 = vmatmul.mubr.f32.gmra.mrb[0].mxu0 %v43
    %v114 = vpop.f32.mrb[0].mxu0
    %v115 = vadd.f32 %v39, %v114
    %v116 = vpop.f32.mrb[0].mxu0
    %117 = vmatprep.mubr.f32.mxu0 0.0
    %118 = vmatmul.mubr.f32.gmra.mrb[0].mxu0 %v46
    %v119 = vpop.f32.mrb[0].mxu0
    %v120 = vadd.f32 %v39, %v119
    %v121 = vpop.f32.mrb[0].mxu0
    %122 = vdwg.mxu0
    %v123 = vmax.f32 %v115, 0.0
    %v124 = vmax.f32 %v120, 0.0
    %v125 = vld [vmem:[%s4] sm:$0xff]
    %v126 = vld [vmem:[%s4 + $0x8] sm:$0xff]
    %v127 = vld [vmem:[%s4 + $0x10] sm:$0xff]
    %v128 = vld [vmem:[%s4 + $0x18] sm:$0xff]
    %v129 = vld [vmem:[%s4 + $0x20] sm:$0xff]
    %v130 = vld [vmem:[%s4 + $0x28] sm:$0xff]
    %v131 = vld [vmem:[%s4 + $0x30] sm:$0xff]
    %v132 = vld [vmem:[%s4 + $0x38] sm:$0xff]
    %v133 = vld [vmem:[%s5] sm:$0x1]
    %v135 = vlaneseq
    %v136 = vshrl.u32 %v135, 7
    %v137 = vsub.s32 0, %v136
    %v138 = vrot.slane %v133, %v137
    %vm140 = vcmask 523264
    %v142 = vsel %vm140, %v123, 0
    %v145 = vsel %vm140, %v124, 0
    %147 = vmatprep.subr.mxu0 0.0
    %148 = vmatpush1.msra.mxu0 %v125
    %149 = vmatprep.subr.mxu0 0.0
    %150 = vmatpush1.msra.mxu0 %v126
    %151 = vmatprep.subr.mxu0 0.0
    %152 = vmatpush1.msra.mxu0 %v127
    %153 = vmatprep.subr.mxu0 0.0
    %154 = vmatpush1.msra.mxu0 %v128
    %155 = vmatprep.subr.mxu0 0.0
    %156 = vmatpush1.msra.mxu0 %v129
    %157 = vmatprep.subr.mxu0 0.0
    %158 = vmatpush1.msra.mxu0 %v130
    %159 = vmatprep.subr.mxu0 0.0
    %160 = vmatpush1.msra.mxu0 %v131
    %161 = vmatprep.subr.mxu0 0.0
    %162 = vmatpush1.msra.mxu0 %v132
    %163 = vmatprep.subr.mxu0 0.0
    %164 = vmatpush1.msra.mxu0 0.0
    %165 = vmatprep.subr.mxu0 0.0
    %166 = vmatpush1.msra.mxu0 0.0
    %167 = vmatprep.subr.mxu0 0.0
    %168 = vmatpush1.msra.mxu0 0.0
    %169 = vmatprep.subr.mxu0 0.0
    %170 = vmatpush1.msra.mxu0 0.0
    %171 = vmatprep.subr.mxu0 0.0
    %172 = vmatpush1.msra.mxu0 0.0
    %173 = vmatprep.subr.mxu0 0.0
    %174 = vmatpush1.msra.mxu0 0.0
    %175 = vmatprep.subr.mxu0 0.0
    %176 = vmatpush1.msra.mxu0 0.0
    %177 = vmatprep.subr.mxu0 0.0
    %178 = vmatpush1.msra.mxu0 0.0
    %179 = vmatprep.subr.mxu0 0.0
    %180 = vmatpush1.msra.mxu0 0.0
    %181 = vmatprep.subr.mxu0 0.0
    %182 = vmatpush1.msra.mxu0 0.0
    %183 = vmatprep.subr.mxu0 0.0
    %184 = vmatpush1.msra.mxu0 0.0
    %185 = vmatprep.subr.mxu0 0.0
    %186 = vmatpush1.msra.mxu0 0.0
    %187 = vmatprep.subr.mxu0 0.0
    %188 = vmatpush1.msra.mxu0 0.0
    %189 = vmatprep.subr.mxu0 0.0
    %190 = vmatpush1.msra.mxu0 0.0
    %191 = vmatprep.subr.mxu0 0.0
    %192 = vmatpush1.msra.mxu0 0.0
    %193 = vmatprep.subr.mxu0 0.0
    %194 = vmatpush1.msra.mxu0 0.0
    %195 = vmatprep.subr.mxu0 0.0
    %196 = vmatpush1.msra.mxu0 0.0
    %197 = vmatprep.subr.mxu0 0.0
    %198 = vmatpush1.msra.mxu0 0.0
    %199 = vmatprep.subr.mxu0 0.0
    %200 = vmatpush1.msra.mxu0 0.0
    %201 = vmatprep.subr.mxu0 0.0
    %202 = vmatpush1.msra.mxu0 0.0
    %203 = vmatprep.subr.mxu0 0.0
    %204 = vmatpush1.msra.mxu0 0.0
    %205 = vmatprep.subr.mxu0 0.0
    %206 = vmatpush1.msra.mxu0 0.0
    %207 = vmatprep.subr.mxu0 0.0
    %208 = vmatpush1.msra.mxu0 0.0
    %209 = vmatprep.subr.mxu0 0.0
    %210 = vmatpush1.msra.mxu0 0.0
    %211 = vmatprep.mubr.f32.mxu0 0.0
    %212 = vmatmul.mubr.f32.gmra.mrb[0].mxu0 %v142
    %v213 = vpop.f32.mrb[0].mxu0
    %v214 = vadd.f32 %v138, %v213
    %v215 = vpop.f32.mrb[0].mxu0
    %216 = vmatprep.mubr.f32.mxu0 0.0
    %217 = vmatmul.mubr.f32.gmra.mrb[0].mxu0 %v145
    %v218 = vpop.f32.mrb[0].mxu0
    %v219 = vadd.f32 %v138, %v218
    %v220 = vpop.f32.mrb[0].mxu0
    %221 = vdwg.mxu0
    %vm222 = vcmask 130048
    %223 = vst.msk [vmem:[#allocation2] sm:$0xff] %vm222, %v214
    %224 = vst.msk [vmem:[#allocation2 + $0x8] sm:$0xff] %vm222, %v219
    // Predicated region
    $region26: #{tpu_custom_call.1} parent=1 // pred_check
      _
    $region27: #{tpu_custom_call.1} parent=1 // pred_check_branch
      %226 = sbr.rel (0) target = $region29
    $region28: #{tpu_custom_call.1} parent=1 // pred_region
      %s228 = ssub.s32 256, 256
      %229 = vsyncadd [#allocation3], %s228
      %s230 = sshll.u32 [#allocation2], 4
      %s231 = int_to_ptr.vmem [resolvable:$true] %s230
      %236 = dma.vmem_to_hbm [thread:$0]  %s231, 256, %s6, [#allocation3], 128, 128, 8
    $region29: #{tpu_custom_call.1} parent=1 // pred_fallthru
      _
    // Predicated region
    $region30: #{tpu_custom_call.1} parent=1 // pred_check
      _
    $region31: #{tpu_custom_call.1} parent=1 // pred_check_branch
      %238 = sbr.rel (0) target = $region33
    $region32: #{tpu_custom_call.1} parent=1 // pred_region
      %239 = dma.done [#allocation3], 256
    $region33: #{tpu_custom_call.1} parent=1 // pred_fallthru
      _
    %240 = vsyncpa [#allocation3], 1

</llo_original>
